<compile_context>
chip_gen: v7x
topology: tpu7x:2x2x1
jax: 0.10.0
libtpu: 0.0.40
codegen_flags: <defaults>
</compile_context>

<pallas_src>
import jax
import jax.numpy as jnp
from jax.experimental import pallas as pl
from jax.experimental.pallas import tpu as pltpu


def _bert_output_kernel(x_ref, w_ref, b_ref, o_ref):
    """One (tm, tn) output tile: single MXU dot with f32 accumulation, bias, cast."""
    acc = jnp.dot(x_ref[...], w_ref[...], preferred_element_type=jnp.float32)
    o_ref[...] = (acc + b_ref[...].astype(jnp.float32)).astype(o_ref.dtype)


def _round_up(x, m):
    return -(-x // m) * m


def _vmem_capacity_bytes():
    try:
        return int(pltpu.get_tpu_info().vmem_capacity_bytes)
    except Exception:
        return 64 << 20  # conservative per-TC floor (v7x)


def _pick_tn(H, I, itemsize, budget):
    """Full H if the (I, H) weight slab fits the VMEM budget (always true for BERT
    shapes); otherwise the largest multiple of 256 dividing H whose slab fits."""
    if I * H * itemsize <= budget or H <= 256:
        return H
    best = None
    t = 256
    while t < H:
        if H % t == 0 and I * t * itemsize <= budget:
            best = t
        t += 256
    return best if best is not None else H


def prepare_bert_output_weight(weight):
    """One-time (parameter-load-time) layout plumbing: torch Linear (H, I) -> (I, H)."""
    return jnp.swapaxes(jnp.asarray(weight), 0, 1)


def bert_output(hidden_states, weight_t, bias, *, tile_m=512):
    """Forward of BertOutput: dense (Linear I->H) + identity dropout.

    hidden_states: (..., I)
    weight_t:      (I, H)  -- pre-transposed once at load time (see prepare_bert_output_weight)
    bias:          (H,)
    """
    *lead, I = hidden_states.shape
    I_w, H = weight_t.shape
    assert I == I_w, (I, I_w)
    assert bias.shape == (H,), bias.shape

    dtype = hidden_states.dtype
    itemsize = jnp.dtype(dtype).itemsize

    x2d = hidden_states.reshape(-1, I)
    M = x2d.shape[0]

    capacity = _vmem_capacity_bytes()

    # Output-feature tiling: keep the weight VMEM-resident whenever it fits.
    tn = _pick_tn(H, I, itemsize, budget=min(24 << 20, capacity // 3))
    grid_n = H // tn

    # Row tiling: multiple of 8; pad M up rather than shrinking to tiny divisors.
    tm = _round_up(min(tile_m, M), 8)
    grid_m = -(-M // tm)
    # v7x megacore: prefer an even (>= 2) number of row tiles when there is >1 tile.
    if grid_m > 1 and grid_m % 2 == 1 and tm % 16 == 0:
        tm //= 2
        grid_m = -(-M // tm)
    M_pad = grid_m * tm
    if M_pad != M:
        x2d = jnp.pad(x2d, ((0, M_pad - M), (0, 0)))

    b2d = bias.reshape(1, H)

    # Honest VMEM working-set estimate (BlockSpec double-buffers each operand).
    vmem_est = (
        2 * tm * I * itemsize      # activation tiles
        + 2 * I * tn * itemsize    # weight slab (resident; allow 2 buffers)
        + 2 * 8 * tn * itemsize    # bias row (sublane-padded)
        + 2 * tm * tn * itemsize   # output tiles
    )
    vmem_limit = min(max(vmem_est + (4 << 20), 32 << 20), int(capacity * 0.9))

    out2d = pl.pallas_call(
        _bert_output_kernel,
        out_shape=jax.ShapeDtypeStruct((M_pad, H), dtype),
        grid_spec=pltpu.PrefetchScalarGridSpec(
            num_scalar_prefetch=0,
            grid=(grid_m, grid_n),
            in_specs=[
                pl.BlockSpec((tm, I), lambda i, j: (i, 0)),   # activations stream over rows
                pl.BlockSpec((I, tn), lambda i, j: (0, j)),   # weight: VMEM-resident slab
                pl.BlockSpec((1, tn), lambda i, j: (0, j)),   # bias (resident)
            ],
            out_specs=pl.BlockSpec((tm, tn), lambda i, j: (i, j)),
        ),
        compiler_params=pltpu.CompilerParams(
            dimension_semantics=("parallel", "parallel"),
            vmem_limit_bytes=vmem_limit,
        ),
    )(x2d, weight_t, b2d)

    if M_pad != M:
        out2d = out2d[:M]
    return out2d.reshape(*lead, H)


if __name__ == "__main__":
    # Small shapes consistent with the module: intermediate_size=128 -> hidden_size=32.
    B, S, I, H = 2, 8, 128, 32

    key = jax.random.PRNGKey(0)
    kx, kw, kb = jax.random.split(key, 3)
    x = jax.random.normal(kx, (B, S, I), jnp.float32)
    weight = (0.05 * jax.random.normal(kw, (H, I))).astype(jnp.float32)  # torch (out, in)
    bias = (0.05 * jax.random.normal(kb, (H,))).astype(jnp.float32)

    # One-time load-time layout plumbing (not part of the forward path).
    weight_t = jax.block_until_ready(prepare_bert_output_weight(weight))

    ref = x @ weight.T + bias

    # f32 path
    out = jax.block_until_ready(bert_output(x, weight_t, bias))
    assert out.shape == (B, S, H)
    assert jnp.allclose(out, ref, atol=1e-4, rtol=1e-4), \
        f"max abs diff {float(jnp.max(jnp.abs(out - ref)))}"

    # bf16 operand path (MXU-native dtype, f32 accumulation inside the kernel)
    out_bf16 = jax.block_until_ready(
        bert_output(x.astype(jnp.bfloat16), weight_t.astype(jnp.bfloat16),
                    bias.astype(jnp.bfloat16)))
    assert jnp.allclose(out_bf16.astype(jnp.float32), ref, atol=5e-2, rtol=5e-2), \
        f"max abs diff (bf16) {float(jnp.max(jnp.abs(out_bf16.astype(jnp.float32) - ref)))}"

    # Ragged-M path (exercises padding + output slice).
    x_rag = x[:1, :5]                               # M = 5, not a multiple of 8
    ref_rag = x_rag @ weight.T + bias
    out_rag = jax.block_until_ready(bert_output(x_rag, weight_t, bias))
    assert out_rag.shape == (1, 5, H)
    assert jnp.allclose(out_rag, ref_rag, atol=1e-4, rtol=1e-4), \
        f"max abs diff (ragged) {float(jnp.max(jnp.abs(out_rag - ref_rag)))}"

    print("KERNEL_OK")
</pallas_src>

<mosaic_0001>
module attributes {stable_mosaic.version = 11 : i64} {
  func.func @_bert_output_kernel(%arg0: i32, %arg1: i32, %arg2: memref<16x128xf32, #tpu.memory_space<vmem>>, %arg3: memref<128x32xf32, #tpu.memory_space<vmem>>, %arg4: memref<1x32xf32, #tpu.memory_space<vmem>>, %arg5: memref<16x32xf32, #tpu.memory_space<vmem>>) attributes {dimension_semantics = [#tpu.dimension_semantics<parallel>, #tpu.dimension_semantics<parallel>], iteration_bounds = array<i64: 1, 1>, scalar_prefetch = 0 : i64, scratch_operands = 0 : i64, tpu.core_type = #tpu.core_type<tc>, window_params = [{transform_indices = @transform_0, window_bounds = array<i64: 16, 128>}, {transform_indices = @transform_1, window_bounds = array<i64: 128, 32>}, {transform_indices = @transform_2, window_bounds = array<i64: 1, 32>}, {transform_indices = @transform_3, window_bounds = array<i64: 16, 32>}]} {
    %c0 = arith.constant 0 : index
    %c0_0 = arith.constant 0 : index
    %0 = vector.load %arg2[%c0, %c0_0] : memref<16x128xf32, #tpu.memory_space<vmem>>, vector<16x128xf32>
    %c0_1 = arith.constant 0 : index
    %c0_2 = arith.constant 0 : index
    %1 = vector.load %arg3[%c0_1, %c0_2] : memref<128x32xf32, #tpu.memory_space<vmem>>, vector<128x32xf32>
    %cst = arith.constant dense<0.000000e+00> : vector<16x32xf32>
    %2 = tpu.matmul %0, %1, %cst {dimension_numbers = #tpu.dot_dimension_numbers<[1], [0], [0], [1], [0, 0, 1, 1], [], []>} : vector<16x128xf32>, vector<128x32xf32>, vector<16x32xf32> -> vector<16x32xf32>
    %c0_3 = arith.constant 0 : index
    %c0_4 = arith.constant 0 : index
    %3 = vector.load %arg4[%c0_3, %c0_4] : memref<1x32xf32, #tpu.memory_space<vmem>>, vector<1x32xf32>
    %4 = vector.broadcast %3 : vector<1x32xf32> to vector<16x32xf32>
    %5 = arith.addf %2, %4 : vector<16x32xf32>
    %c0_5 = arith.constant 0 : index
    %c0_6 = arith.constant 0 : index
    %6 = vector.load %arg5[%c0_5, %c0_6] : memref<16x32xf32, #tpu.memory_space<vmem>>, vector<16x32xf32>
    tpu.vector_store %arg5[%c0_5, %c0_6], %5 {strides = array<i32>} : memref<16x32xf32, #tpu.memory_space<vmem>>, vector<16x32xf32>,
    return
  }
  func.func @transform_0(%arg0: i32, %arg1: i32) -> (i32, i32) {
    %c0_i32 = arith.constant 0 : i32
    %c0_i32_0 = arith.constant 0 : i32
    return %arg0, %c0_i32 : i32, i32
  }
  func.func @transform_1(%arg0: i32, %arg1: i32) -> (i32, i32) {
    %c0_i32 = arith.constant 0 : i32
    %c0_i32_0 = arith.constant 0 : i32
    return %c0_i32, %arg1 : i32, i32
  }
  func.func @transform_2(%arg0: i32, %arg1: i32) -> (i32, i32) {
    %c0_i32 = arith.constant 0 : i32
    %c0_i32_0 = arith.constant 0 : i32
    return %c0_i32, %arg1 : i32, i32
  }
  func.func @transform_3(%arg0: i32, %arg1: i32) -> (i32, i32) {
    %c0_i32 = arith.constant 0 : i32
    return %arg0, %arg1 : i32, i32
  }
}

</mosaic_0001>

<llo_original>
// kernel: tpu_custom_call.1
$region0: #{tpu_custom_call.1}
  #allocation0 [shape = 'u32[]', space=smem, size = 0x4, offset = 0x4, fixed_abs, tag = 'smem constant byte address 0x4 - core index']
  #allocation1 [shape = 'u32[144,128]{1,0:T(1,128)}', space=vmem, size = 0x12000, scoped, tag = 'internal scratch']
  %s0 = inlined_call_operand.vmem [shape: f32[16,128], index: 0, kind: input, shape index: {}]
  %s1 = inlined_call_operand.vmem [shape: f32[128,32], index: 1, kind: input, shape index: {}]
  %s2 = inlined_call_operand.vmem [shape: f32[1,32], index: 2, kind: input, shape index: {}]
  %s3 = inlined_call_operand.hbm [shape: f32[16,32], index: 3, kind: output, shape index: {}]
  %s4 = sld [smem:[#allocation0]]
  $region22: #{tpu_custom_call.1} parent=0
    _
  %s6 = ssub.s32 1, %s4
  %s7 = scalar_select 0, %s6, %s4
  $region1: #{tpu_custom_call.1} parent=0
    #allocation2 [shape = 'u8[8192]{0}', space=vmem, size = 0x2000, scoped, tag = 'output window, operand 0, single buffered']
    #allocation3 [shape = 's32[1]{0}', space=sflag, size = 0x4, scoped, tag = 'scoped memory for tpu_custom_call.1']
    %8 = vsyncpa [#allocation3], 0
    // Predicated region
    $region2: #{tpu_custom_call.1} parent=1 // pred_check
      _
    $region3: #{tpu_custom_call.1} parent=1 // pred_check_branch
      %10 = sbr.rel (0) target = $region5
    $region4: #{tpu_custom_call.1} parent=1 // pred_region
      _
    $region5: #{tpu_custom_call.1} parent=1 // pred_fallthru
      _
    // Predicated region
    $region6: #{tpu_custom_call.1} parent=1 // pred_check
      _
    $region7: #{tpu_custom_call.1} parent=1 // pred_check_branch
      %12 = sbr.rel (0) target = $region9
    $region8: #{tpu_custom_call.1} parent=1 // pred_region
      _
    $region9: #{tpu_custom_call.1} parent=1 // pred_fallthru
      _
    // Predicated region
    $region10: #{tpu_custom_call.1} parent=1 // pred_check
      _
    $region11: #{tpu_custom_call.1} parent=1 // pred_check_branch
      %14 = sbr.rel (0) target = $region13
    $region12: #{tpu_custom_call.1} parent=1 // pred_region
      _
    $region13: #{tpu_custom_call.1} parent=1 // pred_fallthru
      _
    %v15 = vld [vmem:[%s0] sm:$0xff]
    %v16 = vld [vmem:[%s0 + $0x8] sm:$0xff]
    %v17 = vld [vmem:[%s1] sm:$0xff]
    %v18 = vld [vmem:[%s1 + $0x8] sm:$0xff]
    %v19 = vld [vmem:[%s1 + $0x10] sm:$0xff]
    %v20 = vld [vmem:[%s1 + $0x18] sm:$0xff]
    %v21 = vld [vmem:[%s1 + $0x20] sm:$0xff]
    %v22 = vld [vmem:[%s1 + $0x28] sm:$0xff]
    %v23 = vld [vmem:[%s1 + $0x30] sm:$0xff]
    %v24 = vld [vmem:[%s1 + $0x38] sm:$0xff]
    %v25 = vld [vmem:[%s1 + $0x40] sm:$0xff]
    %v26 = vld [vmem:[%s1 + $0x48] sm:$0xff]
    %v27 = vld [vmem:[%s1 + $0x50] sm:$0xff]
    %v28 = vld [vmem:[%s1 + $0x58] sm:$0xff]
    %v29 = vld [vmem:[%s1 + $0x60] sm:$0xff]
    %v30 = vld [vmem:[%s1 + $0x68] sm:$0xff]
    %v31 = vld [vmem:[%s1 + $0x70] sm:$0xff]
    %v32 = vld [vmem:[%s1 + $0x78] sm:$0xff]
    %v33 = vld [vmem:[%s2] sm:$0x1]
    %v35 = vlaneseq
    %v36 = vshrl.u32 %v35, 7
    %v37 = vsub.s32 0, %v36
    %v38 = vrot.slane %v33, %v37
    %40 = vmatprep.subr.mxu0 0.0
    %41 = vmatpush1.msra.mxu0 %v17
    %42 = vmatprep.subr.mxu0 0.0
    %43 = vmatpush1.msra.mxu0 %v18
    %44 = vmatprep.subr.mxu0 0.0
    %45 = vmatpush1.msra.mxu0 %v19
    %46 = vmatprep.subr.mxu0 0.0
    %47 = vmatpush1.msra.mxu0 %v20
    %48 = vmatprep.subr.mxu0 0.0
    %49 = vmatpush1.msra.mxu0 %v21
    %50 = vmatprep.subr.mxu0 0.0
    %51 = vmatpush1.msra.mxu0 %v22
    %52 = vmatprep.subr.mxu0 0.0
    %53 = vmatpush1.msra.mxu0 %v23
    %54 = vmatprep.subr.mxu0 0.0
    %55 = vmatpush1.msra.mxu0 %v24
    %56 = vmatprep.subr.mxu0 0.0
    %57 = vmatpush1.msra.mxu0 %v25
    %58 = vmatprep.subr.mxu0 0.0
    %59 = vmatpush1.msra.mxu0 %v26
    %60 = vmatprep.subr.mxu0 0.0
    %61 = vmatpush1.msra.mxu0 %v27
    %62 = vmatprep.subr.mxu0 0.0
    %63 = vmatpush1.msra.mxu0 %v28
    %64 = vmatprep.subr.mxu0 0.0
    %65 = vmatpush1.msra.mxu0 %v29
    %66 = vmatprep.subr.mxu0 0.0
    %67 = vmatpush1.msra.mxu0 %v30
    %68 = vmatprep.subr.mxu0 0.0
    %69 = vmatpush1.msra.mxu0 %v31
    %70 = vmatprep.subr.mxu0 0.0
    %71 = vmatpush1.msra.mxu0 %v32
    %72 = vmatprep.subr.mxu0 0.0
    %73 = vmatpush1.msra.mxu0 0.0
    %74 = vmatprep.subr.mxu0 0.0
    %75 = vmatpush1.msra.mxu0 0.0
    %76 = vmatprep.subr.mxu0 0.0
    %77 = vmatpush1.msra.mxu0 0.0
    %78 = vmatprep.subr.mxu0 0.0
    %79 = vmatpush1.msra.mxu0 0.0
    %80 = vmatprep.subr.mxu0 0.0
    %81 = vmatpush1.msra.mxu0 0.0
    %82 = vmatprep.subr.mxu0 0.0
    %83 = vmatpush1.msra.mxu0 0.0
    %84 = vmatprep.subr.mxu0 0.0
    %85 = vmatpush1.msra.mxu0 0.0
    %86 = vmatprep.subr.mxu0 0.0
    %87 = vmatpush1.msra.mxu0 0.0
    %88 = vmatprep.subr.mxu0 0.0
    %89 = vmatpush1.msra.mxu0 0.0
    %90 = vmatprep.subr.mxu0 0.0
    %91 = vmatpush1.msra.mxu0 0.0
    %92 = vmatprep.subr.mxu0 0.0
    %93 = vmatpush1.msra.mxu0 0.0
    %94 = vmatprep.subr.mxu0 0.0
    %95 = vmatpush1.msra.mxu0 0.0
    %96 = vmatprep.subr.mxu0 0.0
    %97 = vmatpush1.msra.mxu0 0.0
    %98 = vmatprep.subr.mxu0 0.0
    %99 = vmatpush1.msra.mxu0 0.0
    %100 = vmatprep.subr.mxu0 0.0
    %101 = vmatpush1.msra.mxu0 0.0
    %102 = vmatprep.subr.mxu0 0.0
    %103 = vmatpush1.msra.mxu0 0.0
    %104 = vmatprep.mubr.f32.mxu0 0.0
    %105 = vmatmul.mubr.f32.gmra.mrb[0].mxu0 %v15
    %v106 = vpop.f32.mrb[0].mxu0
    %v107 = vadd.f32 %v38, %v106
    %v108 = vpop.f32.mrb[0].mxu0
    %109 = vmatprep.mubr.f32.mxu0 0.0
    %110 = vmatmul.mubr.f32.gmra.mrb[0].mxu0 %v16
    %v111 = vpop.f32.mrb[0].mxu0
    %v112 = vadd.f32 %v38, %v111
    %v113 = vpop.f32.mrb[0].mxu0
    %114 = vdwg.mxu0
    %vm115 = vcmask 261120
    %116 = vst.msk [vmem:[#allocation2] sm:$0xff] %vm115, %v107
    %117 = vst.msk [vmem:[#allocation2 + $0x8] sm:$0xff] %vm115, %v112
    // Predicated region
    $region14: #{tpu_custom_call.1} parent=1 // pred_check
      _
    $region15: #{tpu_custom_call.1} parent=1 // pred_check_branch
      %119 = sbr.rel (0) target = $region17
    $region16: #{tpu_custom_call.1} parent=1 // pred_region
      %s121 = ssub.s32 256, 256
      %122 = vsyncadd [#allocation3], %s121
      %s123 = sshll.u32 [#allocation2], 4
      %s124 = int_to_ptr.vmem [resolvable:$true] %s123
      %129 = dma.vmem_to_hbm [thread:$0]  %s124, 256, %s3, [#allocation3], 128, 128, 8
    $region17: #{tpu_custom_call.1} parent=1 // pred_fallthru
      _
    // Predicated region
    $region18: #{tpu_custom_call.1} parent=1 // pred_check
      _
    $region19: #{tpu_custom_call.1} parent=1 // pred_check_branch
      %131 = sbr.rel (0) target = $region21
    $region20: #{tpu_custom_call.1} parent=1 // pred_region
      %132 = dma.done [#allocation3], 256
    $region21: #{tpu_custom_call.1} parent=1 // pred_fallthru
      _
    %133 = vsyncpa [#allocation3], 1

</llo_original>
